<compile_context>
chip_gen: v7x
topology: tpu7x:2x2x1
jax: 0.10.0
libtpu: 0.0.40
codegen_flags: <defaults>
</compile_context>

<pallas_src>
import jax
import jax.numpy as jnp
from jax.experimental import pallas as pl
from jax.experimental.pallas import tpu as pltpu


def _round_up(x, m):
    return (x + m - 1) // m * m


def _device_defaults():
    """(tm_max, min_m_tiles, vmem_cap_bytes) per TPU generation."""
    try:
        kind = jax.devices()[0].device_kind.lower()
    except Exception:
        kind = ""
    if "v6" in kind or "trillium" in kind:
        # Single TC, ~918 TF/s vs ~1.4 TB/s -> needs large token tiles to keep
        # the MXU fed on weight-streamed shapes. 128 MiB physical VMEM.
        return 512, 1, 100 << 20
    if "v7" in kind or "7x" in kind:
        # Two TensorCores per chip, but only 64 MiB VMEM per TC.
        return 256, 2, 56 << 20
    if "v5" in kind:
        # v5e: tm=256 matches its roofline; 128 MiB physical VMEM.
        return 256, 1, 100 << 20
    # Unknown chip: conservative.
    return 256, 1, 56 << 20


def _token_tiling(M, tm_max, min_m_tiles):
    """Pick (tm, n_m) with minimal padding and tm a multiple of 8."""
    n = -(-M // tm_max)                       # ceil(M / tm_max)
    if M >= 16:
        n = max(n, min_m_tiles)               # let both v7x TCs get an m-tile
    tm = _round_up(-(-M // n), 8)
    return tm, n


def _vmem_limit_bytes(tm, th, Dp, cap):
    """Double-buffered tile footprint + headroom, clamped to physical VMEM."""
    bf16, f32 = 2, 4
    need = 0
    need += 2 * tm * Dp * bf16                # x tile
    need += 2 * Dp * (2 * th) * bf16          # fused [w1 | w2] tile
    need += 2 * 8 * (2 * th) * f32            # fused bias tile (sublane-padded)
    need += 2 * th * Dp * bf16                # wp tile
    need += 2 * 8 * Dp * f32                  # bp tile
    need += 2 * tm * Dp * f32                 # output tile (f32 accumulator)
    limit = int(need * 1.5) + (4 << 20)       # headroom for compiler temps
    limit = max(limit, 32 << 20)
    return min(limit, cap)


def swiglu_kernel(x_ref, w12_ref, b12_ref, wp_ref, bp_ref, o_ref):
    """One (token-tile, hidden-tile) step.

    grid = (n_m, n_h); hidden axis (index 1) is the reduction. The output tile
    (same block index for every h) is the f32 accumulator — no scratch needed.
    """
    th = wp_ref.shape[0]                      # static hidden-tile size
    h_idx = pl.program_id(1)

    @pl.when(h_idx == 0)
    def _init():
        o_ref[...] = jnp.zeros_like(o_ref)

    x = x_ref[...]                                                   # (TM, Dp) bf16

    # Single fused matmul for both gate paths: (TM, Dp) @ (Dp, 2*TH) -> f32.
    hg = jnp.dot(x, w12_ref[...], preferred_element_type=jnp.float32)
    hg = hg + b12_ref[...].astype(jnp.float32)                       # (TM, 2*TH)

    h = hg[:, :th]                            # ln_1(x) tile  (128-aligned slice)
    g = hg[:, th:]                            # ln_2(x) tile
    act = h * (g * jax.nn.sigmoid(g))         # SwiGLU activation, f32

    # Partial output projection, accumulated in f32 directly in the output tile.
    o_ref[...] += jnp.dot(act.astype(wp_ref.dtype), wp_ref[...],
                          preferred_element_type=jnp.float32)

    @pl.when(h_idx == pl.num_programs(1) - 1)
    def _finalize():
        o_ref[...] += bp_ref[...].astype(jnp.float32)   # c_proj bias, added once


def prepare_params(params, *, th_max=512, compute_dtype=jnp.bfloat16):
    """One-time weight prep (hoisted out of the forward path).

    Pads to (8,128)-aligned tiles, casts to bf16, and fuses (w1, w2) / (b1, b2)
    per hidden tile. Zero padding is exact for this op.
    Layouts (n_h = Hp // th):
      w12: (n_h, Dp, 2*th)   b12: (n_h, 1, 2*th)
      wp : (n_h, th, Dp)     bp : (1, Dp)
    """
    D, H = params["w1"].shape
    Dp = _round_up(D, 128)
    th = min(th_max, _round_up(H, 128))
    Hp = _round_up(H, th)
    n_h = Hp // th

    def pad2(a, rows, cols, dtype):
        a = jnp.asarray(a, dtype)
        return jnp.pad(a, ((0, rows - a.shape[0]), (0, cols - a.shape[1])))

    w1 = pad2(params["w1"], Dp, Hp, compute_dtype).reshape(Dp, n_h, th)
    w2 = pad2(params["w2"], Dp, Hp, compute_dtype).reshape(Dp, n_h, th)
    w12 = jnp.concatenate(
        [w1.transpose(1, 0, 2), w2.transpose(1, 0, 2)], axis=-1)    # (n_h, Dp, 2*th)

    b1 = pad2(params["b1"], 1, Hp, jnp.float32).reshape(n_h, 1, th)
    b2 = pad2(params["b2"], 1, Hp, jnp.float32).reshape(n_h, 1, th)
    b12 = jnp.concatenate([b1, b2], axis=-1)                        # (n_h, 1, 2*th)

    wp = pad2(params["wp"], Hp, Dp, compute_dtype).reshape(n_h, th, Dp)
    bp = pad2(params["bp"], 1, Dp, jnp.float32)                     # (1, Dp)

    return {"w12": w12, "b12": b12, "wp": wp, "bp": bp}


def swiglu_forward(x, w12, b12, wp, bp):
    """x: [B, S, D] float32; packed params from prepare_params()."""
    B, S, D = x.shape
    M = B * S
    n_h, th, Dp = wp.shape
    assert w12.shape == (n_h, Dp, 2 * th)

    tm_max, min_m_tiles, vmem_cap = _device_defaults()
    tm, n_m = _token_tiling(M, tm_max, min_m_tiles)
    Mp = n_m * tm

    x2d = x.reshape(M, D).astype(w12.dtype)
    x2d = jnp.pad(x2d, ((0, Mp - M), (0, Dp - D)))

    out = pl.pallas_call(
        swiglu_kernel,
        out_shape=jax.ShapeDtypeStruct((Mp, Dp), jnp.float32),
        grid_spec=pltpu.PrefetchScalarGridSpec(
            num_scalar_prefetch=0,
            grid=(n_m, n_h),                  # hidden reduction axis is LAST
            in_specs=[
                # x tile: constant in h -> VMEM-resident across the H loop.
                pl.BlockSpec((tm, Dp), lambda m, h: (m, 0)),
                # fused [w1 | w2] tile for hidden block h (leading dim squeezed).
                pl.BlockSpec((None, Dp, 2 * th), lambda m, h: (h, 0, 0)),
                pl.BlockSpec((None, 1, 2 * th), lambda m, h: (h, 0, 0)),
                # c_proj weight tile for hidden block h.
                pl.BlockSpec((None, th, Dp), lambda m, h: (h, 0, 0)),
                pl.BlockSpec((1, Dp), lambda m, h: (0, 0)),
            ],
            # Same output block for every h -> resident f32 accumulator;
            # Dp is a multiple of 128 so stores are lane-dense / unmasked.
            out_specs=pl.BlockSpec((tm, Dp), lambda m, h: (m, 0)),
        ),
        compiler_params=pltpu.CompilerParams(
            dimension_semantics=("parallel", "arbitrary"),
            vmem_limit_bytes=_vmem_limit_bytes(tm, th, Dp, vmem_cap)),
    )(x2d, w12, b12, wp, bp)

    return out[:M, :D].astype(x.dtype).reshape(B, S, D)


def init_params(key, n_embd, hidden_dim):
    """Deterministic init mimicking torch.nn.Linear default (U[-1/sqrt(fan_in), +]).
    Weights are stored transposed vs PyTorch, i.e. [fan_in, fan_out]."""
    ks = jax.random.split(key, 6)

    def lin(kw, kb, fan_in, fan_out):
        bound = 1.0 / (fan_in ** 0.5)
        w = jax.random.uniform(kw, (fan_in, fan_out), jnp.float32, -bound, bound)
        b = jax.random.uniform(kb, (1, fan_out), jnp.float32, -bound, bound)
        return w, b

    w1, b1 = lin(ks[0], ks[1], n_embd, hidden_dim)
    w2, b2 = lin(ks[2], ks[3], n_embd, hidden_dim)
    wp, bp = lin(ks[4], ks[5], hidden_dim, n_embd)
    return {"w1": w1, "b1": b1, "w2": w2, "b2": b2, "wp": wp, "bp": bp}


def reference_forward(x, p):
    h = x @ p["w1"] + p["b1"][0]
    g = x @ p["w2"] + p["b2"][0]
    act = h * (g * jax.nn.sigmoid(g))
    return act @ p["wp"] + p["bp"][0]


if __name__ == "__main__":
    # TODO(synk): despite its name, the PyTorch module is a single dense SwiGLU
    # MLP (no expert routing); real MoE routing would need scalar-prefetched
    # per-group offsets in the x / out index_maps.

    fwd = jax.jit(swiglu_forward)

    # ---- config from the spec: n_embd=8, hidden=4*n_embd=32, batch=3, seq=7 ----
    n_embd, batch, seq = 8, 3, 7
    hidden_dim = 4 * n_embd

    key = jax.random.PRNGKey(0)
    kx, kp, kx2, kp2 = jax.random.split(key, 4)

    x = jax.random.normal(kx, (batch, seq, n_embd), dtype=jnp.float32)
    params = init_params(kp, n_embd, hidden_dim)
    packed = prepare_params(params)

    out = jax.block_until_ready(
        fwd(x, packed["w12"], packed["b12"], packed["wp"], packed["bp"]))
    ref = reference_forward(x, params)
    assert out.shape == (batch, seq, n_embd)
    assert jnp.allclose(out, ref, atol=5e-2, rtol=5e-2), "mismatch vs reference (small)"

    # ---- larger, tile-aligned shapes: exercises a non-trivial (m, h) grid,
    #      the resident f32 output accumulator across the hidden reduction,
    #      the fused w1|w2 matmul, and bf16 MXU compute ----
    D2, H2, B2, S2 = 256, 1024, 2, 160          # M = 320
    x2 = jax.random.normal(kx2, (B2, S2, D2), dtype=jnp.float32)
    params2 = init_params(kp2, D2, H2)
    packed2 = prepare_params(params2)
    out2 = jax.block_until_ready(
        fwd(x2, packed2["w12"], packed2["b12"], packed2["wp"], packed2["bp"]))
    ref2 = reference_forward(x2, params2)
    assert out2.shape == (B2, S2, D2)
    assert jnp.allclose(out2, ref2, atol=5e-2, rtol=5e-2), "mismatch vs reference (large)"

    print("KERNEL_OK")
</pallas_src>

<mosaic_0001>
module attributes {stable_mosaic.version = 11 : i64} {
  func.func @swiglu_kernel(%arg0: i32, %arg1: i32, %arg2: memref<24x128xbf16, #tpu.memory_space<vmem>>, %arg3: memref<1x128x256xbf16, #tpu.memory_space<vmem>>, %arg4: memref<1x1x256xf32, #tpu.memory_space<vmem>>, %arg5: memref<1x128x128xbf16, #tpu.memory_space<vmem>>, %arg6: memref<1x128xf32, #tpu.memory_space<vmem>>, %arg7: memref<24x128xf32, #tpu.memory_space<vmem>>) attributes {dimension_semantics = [#tpu.dimension_semantics<parallel>, #tpu.dimension_semantics<arbitrary>], iteration_bounds = array<i64: 1, 1>, scalar_prefetch = 0 : i64, scratch_operands = 0 : i64, tpu.core_type = #tpu.core_type<tc>, window_params = [{transform_indices = @transform_0, window_bounds = array<i64: 24, 128>}, {transform_indices = @transform_1, window_bounds = array<i64: 1, 128, 256>}, {transform_indices = @transform_2, window_bounds = array<i64: 1, 1, 256>}, {transform_indices = @transform_3, window_bounds = array<i64: 1, 128, 128>}, {pipeline_mode = #tpu.pipeline_mode<synchronous>, transform_indices = @transform_4, window_bounds = array<i64: 1, 128>}, {transform_indices = @transform_5, window_bounds = array<i64: 24, 128>}]} {
    %c0_i32 = arith.constant 0 : i32
    %0 = arith.cmpi eq, %arg1, %c0_i32 : i32
    %1 = arith.extui %0 : i1 to i32
    %c0_i32_0 = arith.constant 0 : i32
    %2 = arith.cmpi ne, %1, %c0_i32_0 : i32
    scf.if %2 {
      %cst_19 = arith.constant 0.000000e+00 : f32
      %30 = vector.broadcast %cst_19 : f32 to vector<24x128xf32>
      %c0_20 = arith.constant 0 : index
      %c0_21 = arith.constant 0 : index
      %31 = vector.load %arg7[%c0_20, %c0_21] : memref<24x128xf32, #tpu.memory_space<vmem>>, vector<24x128xf32>
      tpu.vector_store %arg7[%c0_20, %c0_21], %30 {strides = array<i32>} : memref<24x128xf32, #tpu.memory_space<vmem>>, vector<24x128xf32>,
    } else {
    }
    %c0 = arith.constant 0 : index
    %c0_1 = arith.constant 0 : index
    %3 = vector.load %arg2[%c0, %c0_1] : memref<24x128xbf16, #tpu.memory_space<vmem>>, vector<24x128xbf16>
    %c0_2 = arith.constant 0 : index
    %c0_3 = arith.constant 0 : index
    %c0_4 = arith.constant 0 : index
    %4 = vector.load %arg3[%c0_2, %c0_3, %c0_4] : memref<1x128x256xbf16, #tpu.memory_space<vmem>>, vector<1x128x256xbf16>
    %5 = vector.shape_cast %4 : vector<1x128x256xbf16> to vector<128x256xbf16>
    %cst = arith.constant dense<0.000000e+00> : vector<24x256xf32>
    %6 = tpu.matmul %3, %5, %cst {dimension_numbers = #tpu.dot_dimension_numbers<[1], [0], [0], [1], [0, 0, 1, 1], [], []>} : vector<24x128xbf16>, vector<128x256xbf16>, vector<24x256xf32> -> vector<24x256xf32>
    %c0_5 = arith.constant 0 : index
    %c0_6 = arith.constant 0 : index
    %c0_7 = arith.constant 0 : index
    %7 = vector.load %arg4[%c0_5, %c0_6, %c0_7] : memref<1x1x256xf32, #tpu.memory_space<vmem>>, vector<1x1x256xf32>
    %8 = vector.shape_cast %7 : vector<1x1x256xf32> to vector<1x256xf32>
    %9 = vector.broadcast %8 : vector<1x256xf32> to vector<24x256xf32>
    %10 = arith.addf %6, %9 : vector<24x256xf32>
    %11 = vector.extract_strided_slice %10 {offsets = [0, 0], sizes = [24, 128], strides = [1, 1]} : vector<24x256xf32> to vector<24x128xf32>
    %12 = vector.extract_strided_slice %10 {offsets = [0, 128], sizes = [24, 128], strides = [1, 1]} : vector<24x256xf32> to vector<24x128xf32>
    %13 = arith.negf %12 : vector<24x128xf32>
    %14 = math.exp %13 : vector<24x128xf32>
    %cst_8 = arith.constant 1.000000e+00 : f32
    %15 = vector.broadcast %cst_8 : f32 to vector<24x128xf32>
    %16 = arith.addf %15, %14 : vector<24x128xf32>
    %17 = arith.divf %15, %16 : vector<24x128xf32>
    %18 = arith.mulf %12, %17 : vector<24x128xf32>
    %19 = arith.mulf %11, %18 : vector<24x128xf32>
    %c0_9 = arith.constant 0 : index
    %c0_10 = arith.constant 0 : index
    %20 = vector.load %arg7[%c0_9, %c0_10] : memref<24x128xf32, #tpu.memory_space<vmem>>, vector<24x128xf32>
    %21 = arith.truncf %19 : vector<24x128xf32> to vector<24x128xbf16>
    %c0_11 = arith.constant 0 : index
    %c0_12 = arith.constant 0 : index
    %c0_13 = arith.constant 0 : index
    %22 = vector.load %arg5[%c0_11, %c0_12, %c0_13] : memref<1x128x128xbf16, #tpu.memory_space<vmem>>, vector<1x128x128xbf16>
    %23 = vector.shape_cast %22 : vector<1x128x128xbf16> to vector<128x128xbf16>
    %cst_14 = arith.constant dense<0.000000e+00> : vector<24x128xf32>
    %24 = tpu.matmul %21, %23, %cst_14 {dimension_numbers = #tpu.dot_dimension_numbers<[1], [0], [0], [1], [0, 0, 1, 1], [], []>} : vector<24x128xbf16>, vector<128x128xbf16>, vector<24x128xf32> -> vector<24x128xf32>
    %25 = arith.addf %20, %24 : vector<24x128xf32>
    %c0_15 = arith.constant 0 : index
    %c0_16 = arith.constant 0 : index
    %26 = vector.load %arg7[%c0_15, %c0_16] : memref<24x128xf32, #tpu.memory_space<vmem>>, vector<24x128xf32>
    tpu.vector_store %arg7[%c0_15, %c0_16], %25 {strides = array<i32>} : memref<24x128xf32, #tpu.memory_space<vmem>>, vector<24x128xf32>,
    %c0_i32_17 = arith.constant 0 : i32
    %27 = arith.cmpi eq, %arg1, %c0_i32_17 : i32
    %28 = arith.extui %27 : i1 to i32
    %c0_i32_18 = arith.constant 0 : i32
    %29 = arith.cmpi ne, %28, %c0_i32_18 : i32
    scf.if %29 {
      %c0_19 = arith.constant 0 : index
      %c0_20 = arith.constant 0 : index
      %30 = vector.load %arg7[%c0_19, %c0_20] : memref<24x128xf32, #tpu.memory_space<vmem>>, vector<24x128xf32>
      %c0_21 = arith.constant 0 : index
      %c0_22 = arith.constant 0 : index
      %31 = vector.load %arg6[%c0_21, %c0_22] : memref<1x128xf32, #tpu.memory_space<vmem>>, vector<1x128xf32>
      %32 = vector.broadcast %31 : vector<1x128xf32> to vector<24x128xf32>
      %33 = arith.addf %30, %32 : vector<24x128xf32>
      %c0_23 = arith.constant 0 : index
      %c0_24 = arith.constant 0 : index
      %34 = vector.load %arg7[%c0_23, %c0_24] : memref<24x128xf32, #tpu.memory_space<vmem>>, vector<24x128xf32>
      tpu.vector_store %arg7[%c0_23, %c0_24], %33 {strides = array<i32>} : memref<24x128xf32, #tpu.memory_space<vmem>>, vector<24x128xf32>,
    } else {
    }
    return
  }
  func.func @transform_0(%arg0: i32, %arg1: i32) -> (i32, i32) {
    %c0_i32 = arith.constant 0 : i32
    %c0_i32_0 = arith.constant 0 : i32
    return %arg0, %c0_i32 : i32, i32
  }
  func.func @transform_1(%arg0: i32, %arg1: i32) -> (i32, i32, i32) {
    %c0_i32 = arith.constant 0 : i32
    %c0_i32_0 = arith.constant 0 : i32
    %c0_i32_1 = arith.constant 0 : i32
    return %arg1, %c0_i32, %c0_i32_0 : i32, i32, i32
  }
  func.func @transform_2(%arg0: i32, %arg1: i32) -> (i32, i32, i32) {
    %c0_i32 = arith.constant 0 : i32
    %c0_i32_0 = arith.constant 0 : i32
    %c0_i32_1 = arith.constant 0 : i32
    return %arg1, %c0_i32, %c0_i32_0 : i32, i32, i32
  }
  func.func @transform_3(%arg0: i32, %arg1: i32) -> (i32, i32, i32) {
    %c0_i32 = arith.constant 0 : i32
    %c0_i32_0 = arith.constant 0 : i32
    %c0_i32_1 = arith.constant 0 : i32
    return %arg1, %c0_i32, %c0_i32_0 : i32, i32, i32
  }
  func.func @transform_4(%arg0: i32, %arg1: i32) -> (i32, i32) {
    %c0_i32 = arith.constant 0 : i32
    %c0_i32_0 = arith.constant 0 : i32
    %c0_i32_1 = arith.constant 0 : i32
    return %c0_i32, %c0_i32_0 : i32, i32
  }
  func.func @transform_5(%arg0: i32, %arg1: i32) -> (i32, i32) {
    %c0_i32 = arith.constant 0 : i32
    %c0_i32_0 = arith.constant 0 : i32
    return %arg0, %c0_i32 : i32, i32
  }
}

</mosaic_0001>

<llo_original>
// kernel: swiglu_forward.1
$region0: #{swiglu_forward.1}
  #allocation0 [shape = 'u32[]', space=smem, size = 0x4, offset = 0x4, fixed_abs, tag = 'smem constant byte address 0x4 - core index']
  #allocation1 [shape = 'u32[144,128]{1,0:T(1,128)}', space=vmem, size = 0x12000, scoped, tag = 'internal scratch']
  %s0 = inlined_call_operand.vmem [shape: bf16[24,128], index: 0, kind: input, shape index: {}]
  %s1 = inlined_call_operand.hbm [shape: bf16[1,128,256], index: 1, kind: input, shape index: {}]
  %s2 = inlined_call_operand.vmem [shape: f32[1,1,256], index: 2, kind: input, shape index: {}]
  %s3 = inlined_call_operand.vmem [shape: bf16[1,128,128], index: 3, kind: input, shape index: {}]
  %s4 = inlined_call_operand.vmem [shape: f32[1,128], index: 4, kind: input, shape index: {}]
  %s5 = inlined_call_operand.vmem [shape: f32[24,128], index: 5, kind: output, shape index: {}]
  %s6 = sld [smem:[#allocation0]]
  $region42: #{swiglu_forward.1} parent=0
    _
  %s8 = ssub.s32 1, %s6
  %s9 = scalar_select 0, %s8, %s6
  $region1: #{swiglu_forward.1} parent=0
    #allocation2 [shape = 'u8[65536]{0}', space=vmem, size = 0x10000, scoped, tag = 'input window, operand 1, single buffered']
    #allocation3 [shape = 's32[1]{0}', space=sflag, size = 0x4, scoped, tag = 'scoped memory for swiglu_forward.1']
    %10 = vsyncpa [#allocation3], 0
    // Predicated region
    $region2: #{swiglu_forward.1} parent=1 // pred_check
      _
    $region3: #{swiglu_forward.1} parent=1 // pred_check_branch
      %12 = sbr.rel (0) target = $region5
    $region4: #{swiglu_forward.1} parent=1 // pred_region
      _
    $region5: #{swiglu_forward.1} parent=1 // pred_fallthru
      _
    // Predicated region
    $region6: #{swiglu_forward.1} parent=1 // pred_check
      _
    $region7: #{swiglu_forward.1} parent=1 // pred_check_branch
      %14 = sbr.rel (0) target = $region9
    $region8: #{swiglu_forward.1} parent=1 // pred_region
      %s16 = ssub.s32 2048, 2048
      %17 = vsyncadd [#allocation3], %s16
      %s18 = sshll.u32 [#allocation2], 4
      %s19 = int_to_ptr.vmem [resolvable:$true] %s18
      %24 = dma.hbm_to_vmem [thread:$0]  %s1, 2048, %s19, [#allocation3], 128, 128, 8
    $region9: #{swiglu_forward.1} parent=1 // pred_fallthru
      _
    // Predicated region
    $region10: #{swiglu_forward.1} parent=1 // pred_check
      _
    $region11: #{swiglu_forward.1} parent=1 // pred_check_branch
      %26 = sbr.rel (0) target = $region13
    $region12: #{swiglu_forward.1} parent=1 // pred_region
      _
    $region13: #{swiglu_forward.1} parent=1 // pred_fallthru
      _
    // Predicated region
    $region14: #{swiglu_forward.1} parent=1 // pred_check
      _
    $region15: #{swiglu_forward.1} parent=1 // pred_check_branch
      %28 = sbr.rel (0) target = $region17
    $region16: #{swiglu_forward.1} parent=1 // pred_region
      _
    $region17: #{swiglu_forward.1} parent=1 // pred_fallthru
      _
    // Predicated region
    $region18: #{swiglu_forward.1} parent=1 // pred_check
      _
    $region19: #{swiglu_forward.1} parent=1 // pred_check_branch
      %30 = sbr.rel (0) target = $region21
    $region20: #{swiglu_forward.1} parent=1 // pred_region
      _
    $region21: #{swiglu_forward.1} parent=1 // pred_fallthru
      _
    // Predicated region
    $region22: #{swiglu_forward.1} parent=1 // pred_check
      _
    $region23: #{swiglu_forward.1} parent=1 // pred_check_branch
      %32 = sbr.rel (0) target = $region25
    $region24: #{swiglu_forward.1} parent=1 // pred_region
      %33 = dma.done [#allocation3], 2048
    $region25: #{swiglu_forward.1} parent=1 // pred_fallthru
      _
    %p35 = scmp.eq.s32.totalorder 0, 0
    // Predicated region
    $region26: #{swiglu_forward.1} parent=1 // pred_check
      %p36 = pneg %p35
    $region27: #{swiglu_forward.1} parent=1 // pred_check_branch
      %38 = sbr.rel (%p36) target = $region29
    $region28: #{swiglu_forward.1} parent=1 // pred_region
      %39 = vst [vmem:[%s5] sm:$0xff] 0.0
      %40 = vst [vmem:[%s5 + $0x8] sm:$0xff] 0.0
      %41 = vst [vmem:[%s5 + $0x10] sm:$0xff] 0.0
    $region29: #{swiglu_forward.1} parent=1 // pred_fallthru
      _
    %v42 = vld [vmem:[%s0] sm:$0xf]
    %v43 = vld [vmem:[%s0 + $0x4] sm:$0xf]
    %v44 = vld [vmem:[%s0 + $0x8] sm:$0xf]
    %v45 = vld [vmem:[#allocation2] sm:$0xff]
    %v46 = vld [vmem:[#allocation2 + $0x8] sm:$0xff]
    %v47 = vld [vmem:[#allocation2 + $0x10] sm:$0xff]
    %v48 = vld [vmem:[#allocation2 + $0x18] sm:$0xff]
    %v49 = vld [vmem:[#allocation2 + $0x20] sm:$0xff]
    %v50 = vld [vmem:[#allocation2 + $0x28] sm:$0xff]
    %v51 = vld [vmem:[#allocation2 + $0x30] sm:$0xff]
    %v52 = vld [vmem:[#allocation2 + $0x38] sm:$0xff]
    %v53 = vld [vmem:[#allocation2 + $0x40] sm:$0xff]
    %v54 = vld [vmem:[#allocation2 + $0x48] sm:$0xff]
    %v55 = vld [vmem:[#allocation2 + $0x50] sm:$0xff]
    %v56 = vld [vmem:[#allocation2 + $0x58] sm:$0xff]
    %v57 = vld [vmem:[#allocation2 + $0x60] sm:$0xff]
    %v58 = vld [vmem:[#allocation2 + $0x68] sm:$0xff]
    %v59 = vld [vmem:[#allocation2 + $0x70] sm:$0xff]
    %v60 = vld [vmem:[#allocation2 + $0x78] sm:$0xff]
    %v61 = vld [vmem:[%s2] sm:$0x3]
    %v63 = vlaneseq
    %v64 = vshrl.u32 %v63, 7
    %v65 = vsub.s32 0, %v64
    %v66 = vrot.slane %v61, %v65
    %v67 = vlaneseq
    %v68 = vshrl.u32 %v67, 7
    %v69 = vsub.s32 1, %v68
    %v70 = vrot.slane %v61, %v69
    %v76 = vunpack.c.l.b16 %v42
    %v77 = vunpack.c.l.b16 %v43
    %v78 = vunpack.c.l.b16 %v44
    %v79 = vpack.c.b16 %v77, %v76
    %v80 = vpack.c.b16 %v78, %v78
    %v99 = vunpack.c.l.b16 %v45
    %v100 = vunpack.c.h.b16 %v45
    %v101 = vunpack.c.l.b16 %v46
    %v102 = vunpack.c.h.b16 %v46
    %v103 = vunpack.c.l.b16 %v47
    %v104 = vunpack.c.h.b16 %v47
    %v105 = vunpack.c.l.b16 %v48
    %v106 = vunpack.c.h.b16 %v48
    %v107 = vunpack.c.l.b16 %v49
    %v108 = vunpack.c.h.b16 %v49
    %v109 = vunpack.c.l.b16 %v50
    %v110 = vunpack.c.h.b16 %v50
    %v111 = vunpack.c.l.b16 %v51
    %v112 = vunpack.c.h.b16 %v51
    %v113 = vunpack.c.l.b16 %v52
    %v114 = vunpack.c.h.b16 %v52
    %v115 = vunpack.c.l.b16 %v53
    %v116 = vunpack.c.h.b16 %v53
    %v117 = vunpack.c.l.b16 %v54
    %v118 = vunpack.c.h.b16 %v54
    %v119 = vunpack.c.l.b16 %v55
    %v120 = vunpack.c.h.b16 %v55
    %v121 = vunpack.c.l.b16 %v56
    %v122 = vunpack.c.h.b16 %v56
    %v123 = vunpack.c.l.b16 %v57
    %v124 = vunpack.c.h.b16 %v57
    %v125 = vunpack.c.l.b16 %v58
    %v126 = vunpack.c.h.b16 %v58
    %v127 = vunpack.c.l.b16 %v59
    %v128 = vunpack.c.h.b16 %v59
    %v129 = vunpack.c.l.b16 %v60
    %v130 = vunpack.c.h.b16 %v60
    %v131 = vpack.c.b16 %v101, %v99
    %v132 = vpack.c.b16 %v102, %v100
    %v133 = vpack.c.b16 %v105, %v103
    %v134 = vpack.c.b16 %v106, %v104
    %v135 = vpack.c.b16 %v109, %v107
    %v136 = vpack.c.b16 %v110, %v108
    %v137 = vpack.c.b16 %v113, %v111
    %v138 = vpack.c.b16 %v114, %v112
    %v139 = vpack.c.b16 %v117, %v115
    %v140 = vpack.c.b16 %v118, %v116
    %v141 = vpack.c.b16 %v121, %v119
    %v142 = vpack.c.b16 %v122, %v120
    %v143 = vpack.c.b16 %v125, %v123
    %v144 = vpack.c.b16 %v126, %v124
    %v145 = vpack.c.b16 %v129, %v127
    %v146 = vpack.c.b16 %v130, %v128
    %163 = vmatprep.subr.bf16.mxu0 %v132
    %164 = vmatpush1.bf16.msra.mxu0 %v131
    %165 = vmatprep.subr.bf16.mxu0 %v134
    %166 = vmatpush1.bf16.msra.mxu0 %v133
    %167 = vmatprep.subr.bf16.mxu0 %v136
    %168 = vmatpush1.bf16.msra.mxu0 %v135
    %169 = vmatprep.subr.bf16.mxu0 %v138
    %170 = vmatpush1.bf16.msra.mxu0 %v137
    %171 = vmatprep.subr.bf16.mxu0 %v140
    %172 = vmatpush1.bf16.msra.mxu0 %v139
    %173 = vmatprep.subr.bf16.mxu0 %v142
    %174 = vmatpush1.bf16.msra.mxu0 %v141
    %175 = vmatprep.subr.bf16.mxu0 %v144
    %176 = vmatpush1.bf16.msra.mxu0 %v143
    %177 = vmatprep.subr.bf16.mxu0 %v146
    %178 = vmatpush1.bf16.msra.mxu0 %v145
    %179 = vmatprep.subr.bf16.mxu0 0
    %180 = vmatpush1.bf16.msra.mxu0 0
    %181 = vmatprep.subr.bf16.mxu0 0
    %182 = vmatpush1.bf16.msra.mxu0 0
    %183 = vmatprep.subr.bf16.mxu0 0
    %184 = vmatpush1.bf16.msra.mxu0 0
    %185 = vmatprep.subr.bf16.mxu0 0
    %186 = vmatpush1.bf16.msra.mxu0 0
    %187 = vmatprep.subr.bf16.mxu0 0
    %188 = vmatpush1.bf16.msra.mxu0 0
    %189 = vmatprep.subr.bf16.mxu0 0
    %190 = vmatpush1.bf16.msra.mxu0 0
    %191 = vmatprep.subr.bf16.mxu0 0
    %192 = vmatpush1.bf16.msra.mxu0 0
    %193 = vmatprep.subr.bf16.mxu0 0
    %194 = vmatpush1.bf16.msra.mxu0 0
    %195 = vmatprep.mubr.bf16.mxu0 0
    %196 = vmatmul.mubr.bf16.gmra.mrb[0].mxu0 %v79
    %v197 = vpop.f32.mrb[0].mxu0
    %v198 = vadd.f32 %v66, %v197
    %v199 = vpop.f32.mrb[0].mxu0
    %v200 = vadd.f32 %v70, %v199
    %v201 = vpop.f32.mrb[0].mxu0
    %v202 = vadd.f32 %v66, %v201
    %v203 = vpop.f32.mrb[0].mxu0
    %v204 = vadd.f32 %v70, %v203
    %205 = vmatprep.mubr.bf16.mxu0 0
    %206 = vmatmul.mubr.bf16.gmra.mrb[0].mxu0 %v80
    %v207 = vpop.f32.mrb[0].mxu0
    %v208 = vadd.f32 %v66, %v207
    %v209 = vpop.f32.mrb[0].mxu0
    %v210 = vadd.f32 %v70, %v209
    %v211 = vpop.f32.mrb[0].mxu0
    %v212 = vpop.f32.mrb[0].mxu0
    %213 = vdwg.mxu0
    %v214 = vxor.u32 %v200, 2147483648
    %v215 = vxor.u32 %v204, 2147483648
    %v216 = vxor.u32 %v210, 2147483648
    %v217 = vmul.f32 %v214, 1.442695
    %v218 = vpow.pop %v217
    %v219 = vmul.f32 %v215, 1.442695
    %v220 = vpow.pop %v219
    %v221 = vmul.f32 %v216, 1.442695
    %v222 = vpow.pop %v221
    %v223 = vadd.f32 %v218, 1.0
    %v224 = vadd.f32 %v220, 1.0
    %v225 = vadd.f32 %v222, 1.0
    %v226 = vrcp.pop %v223
    %v227 = vmul.f32 1.0, %v226
    %v228 = vrcp.pop %v224
    %v229 = vmul.f32 1.0, %v228
    %v230 = vrcp.pop %v225
    %v231 = vmul.f32 1.0, %v230
    %v232 = vmul.f32 %v200, %v227
    %v233 = vmul.f32 %v204, %v229
    %v234 = vmul.f32 %v210, %v231
    %v235 = vmul.f32 %v198, %v232
    %v236 = vmul.f32 %v202, %v233
    %v237 = vmul.f32 %v208, %v234
    %v238 = vld [vmem:[%s5] sm:$0xff]
    %v239 = vld [vmem:[%s5 + $0x8] sm:$0xff]
    %v240 = vld [vmem:[%s5 + $0x10] sm:$0xff]
    %v241 = vpack.c.bf16 %v236, %v235
    %v242 = vpack.c.bf16 %v237, %v237
    %v243 = vld [vmem:[%s3] sm:$0xf]
    %v244 = vld [vmem:[%s3 + $0x4] sm:$0xf]
    %v245 = vld [vmem:[%s3 + $0x8] sm:$0xf]
    %v246 = vld [vmem:[%s3 + $0xc] sm:$0xf]
    %v247 = vld [vmem:[%s3 + $0x10] sm:$0xf]
    %v248 = vld [vmem:[%s3 + $0x14] sm:$0xf]
    %v249 = vld [vmem:[%s3 + $0x18] sm:$0xf]
    %v250 = vld [vmem:[%s3 + $0x1c] sm:$0xf]
    %v251 = vld [vmem:[%s3 + $0x20] sm:$0xf]
    %v252 = vld [vmem:[%s3 + $0x24] sm:$0xf]
    %v253 = vld [vmem:[%s3 + $0x28] sm:$0xf]
    %v254 = vld [vmem:[%s3 + $0x2c] sm:$0xf]
    %v255 = vld [vmem:[%s3 + $0x30] sm:$0xf]
    %v256 = vld [vmem:[%s3 + $0x34] sm:$0xf]
    %v257 = vld [vmem:[%s3 + $0x38] sm:$0xf]
    %v258 = vld [vmem:[%s3 + $0x3c] sm:$0xf]
    %v275 = vunpack.c.l.b16 %v243
    %v276 = vunpack.c.l.b16 %v244
    %v277 = vunpack.c.l.b16 %v245
    %v278 = vunpack.c.l.b16 %v246
    %v279 = vunpack.c.l.b16 %v247
    %v280 = vunpack.c.l.b16 %v248
    %v281 = vunpack.c.l.b16 %v249
    %v282 = vunpack.c.l.b16 %v250
    %v283 = vunpack.c.l.b16 %v251
    %v284 = vunpack.c.l.b16 %v252
    %v285 = vunpack.c.l.b16 %v253
    %v286 = vunpack.c.l.b16 %v254
    %v287 = vunpack.c.l.b16 %v255
    %v288 = vunpack.c.l.b16 %v256
    %v289 = vunpack.c.l.b16 %v257
    %v290 = vunpack.c.l.b16 %v258
    %v291 = vpack.c.b16 %v276, %v275
    %v292 = vpack.c.b16 %v278, %v277
    %v293 = vpack.c.b16 %v280, %v279
    %v294 = vpack.c.b16 %v282, %v281
    %v295 = vpack.c.b16 %v284, %v283
    %v296 = vpack.c.b16 %v286, %v285
    %v297 = vpack.c.b16 %v288, %v287
    %v298 = vpack.c.b16 %v290, %v289
    %307 = vmatprep.subr.bf16.mxu0 0
    %308 = vmatpush1.bf16.msra.mxu0 %v291
    %309 = vmatprep.subr.bf16.mxu0 0
    %310 = vmatpush1.bf16.msra.mxu0 %v292
    %311 = vmatprep.subr.bf16.mxu0 0
    %312 = vmatpush1.bf16.msra.mxu0 %v293
    %313 = vmatprep.subr.bf16.mxu0 0
    %314 = vmatpush1.bf16.msra.mxu0 %v294
    %315 = vmatprep.subr.bf16.mxu0 0
    %316 = vmatpush1.bf16.msra.mxu0 %v295
    %317 = vmatprep.subr.bf16.mxu0 0
    %318 = vmatpush1.bf16.msra.mxu0 %v296
    %319 = vmatprep.subr.bf16.mxu0 0
    %320 = vmatpush1.bf16.msra.mxu0 %v297
    %321 = vmatprep.subr.bf16.mxu0 0
    %322 = vmatpush1.bf16.msra.mxu0 %v298
    %323 = vmatprep.subr.bf16.mxu0 0
    %324 = vmatpush1.bf16.msra.mxu0 0
    %325 = vmatprep.subr.bf16.mxu0 0
    %326 = vmatpush1.bf16.msra.mxu0 0
    %327 = vmatprep.subr.bf16.mxu0 0
    %328 = vmatpush1.bf16.msra.mxu0 0
    %329 = vmatprep.subr.bf16.mxu0 0
    %330 = vmatpush1.bf16.msra.mxu0 0
    %331 = vmatprep.subr.bf16.mxu0 0
    %332 = vmatpush1.bf16.msra.mxu0 0
    %333 = vmatprep.subr.bf16.mxu0 0
    %334 = vmatpush1.bf16.msra.mxu0 0
    %335 = vmatprep.subr.bf16.mxu0 0
    %336 = vmatpush1.bf16.msra.mxu0 0
    %337 = vmatprep.subr.bf16.mxu0 0
    %338 = vmatpush1.bf16.msra.mxu0 0
    %339 = vmatprep.mubr.bf16.mxu0 0
    %340 = vmatmul.mubr.bf16.gmra.mrb[0].mxu0 %v241
    %v341 = vpop.f32.mrb[0].mxu0
    %v342 = vadd.f32 0.0, %v341
    %v343 = vpop.f32.mrb[0].mxu0
    %v344 = vpop.f32.mrb[0].mxu0
    %v345 = vadd.f32 0.0, %v344
    %v346 = vpop.f32.mrb[0].mxu0
    %347 = vmatprep.mubr.bf16.mxu0 0
    %348 = vmatmul.mubr.bf16.gmra.mrb[0].mxu0 %v242
    %v349 = vpop.f32.mrb[0].mxu0
    %v350 = vadd.f32 0.0, %v349
    %v351 = vpop.f32.mrb[0].mxu0
    %v352 = vpop.f32.mrb[0].mxu0
    %v353 = vpop.f32.mrb[0].mxu0
    %354 = vdwg.mxu0
    %v355 = vadd.f32 %v238, %v342
    %v356 = vadd.f32 %v239, %v345
    %v357 = vadd.f32 %v240, %v350
    %358 = vst [vmem:[%s5] sm:$0xff] %v355
    %359 = vst [vmem:[%s5 + $0x8] sm:$0xff] %v356
    %360 = vst [vmem:[%s5 + $0x10] sm:$0xff] %v357
    // Predicated region
    $region30: #{swiglu_forward.1} parent=1 // pred_check
      %p361 = pneg %p35
    $region31: #{swiglu_forward.1} parent=1 // pred_check_branch
      %363 = sbr.rel (%p361) target = $region33
    $region32: #{swiglu_forward.1} parent=1 // pred_region
      %v364 = vld [vmem:[%s5] sm:$0xff]
      %v365 = vld [vmem:[%s5 + $0x8] sm:$0xff]
      %v366 = vld [vmem:[%s5 + $0x10] sm:$0xff]
      %v367 = vld [vmem:[%s4] sm:$0x1]
      %v369 = vlaneseq
      %v370 = vshrl.u32 %v369, 7
      %v371 = vsub.s32 0, %v370
      %v372 = vrot.slane %v367, %v371
      %v374 = vadd.f32 %v364, %v372
      %v375 = vadd.f32 %v365, %v372
      %v376 = vadd.f32 %v366, %v372
      %377 = vst [vmem:[%s5] sm:$0xff] %v374
      %378 = vst [vmem:[%s5 + $0x8] sm:$0xff] %v375
      %379 = vst [vmem:[%s5 + $0x10] sm:$0xff] %v376
    $region33: #{swiglu_forward.1} parent=1 // pred_fallthru
      _
    // Predicated region
    $region34: #{swiglu_forward.1} parent=1 // pred_check
      _
    $region35: #{swiglu_forward.1} parent=1 // pred_check_branch
      %381 = sbr.rel (0) target = $region37
    $region36: #{swiglu_forward.1} parent=1 // pred_region
      _
    $region37: #{swiglu_forward.1} parent=1 // pred_fallthru
      _
    // Predicated region
    $region38: #{swiglu_forward.1} parent=1 // pred_check
      _
    $region39: #{swiglu_forward.1} parent=1 // pred_check_branch
      %383 = sbr.rel (0) target = $region41
    $region40: #{swiglu_forward.1} parent=1 // pred_region
      _
    $region41: #{swiglu_forward.1} parent=1 // pred_fallthru
      _
    %384 = vsyncpa [#allocation3], 1

</llo_original>
